<compile_context>
chip_gen: v7x
topology: tpu7x:2x2x1
jax: 0.10.0
libtpu: 0.0.40
codegen_flags: <defaults>
</compile_context>

<pallas_src>
import functools

import jax
import jax.numpy as jnp
from jax import lax
from jax.experimental import pallas as pl
from jax.experimental.pallas import tpu as pltpu

EPS = 1e-5
MOMENTUM = 0.9

_FUSED_THRESHOLD_BYTES = 2 << 20       # whole-x-resident fast path cutoff (f32 bytes)
_TILED_TARGET_BLOCK_BYTES = 4 << 20    # per-x-block budget for the tiled path
_TILED_VMEM_LIMIT = 48 * 1024 * 1024   # fits v7x 64 MiB physical VMEM with headroom
_FUSED_VMEM_LIMIT = 32 * 1024 * 1024


# --------------------------------------------------------------------------
# Kernels
# --------------------------------------------------------------------------
def _fused_bn_kernel(x_ref, gamma_ref, beta_ref, y_ref, mean_ref, var_ref, *,
                     eps, inv_total):
    """Whole-x-resident BatchNorm: stats + normalize in one kernel.

    x_ref:               (N, C, HW)   input (any float dtype)
    gamma_ref, beta_ref: (C, 1)       f32
    y_ref:               (N, C, HW)   output (x dtype)
    mean_ref, var_ref:   (C, 1)       f32 batch statistics
    """
    x = x_ref[...].astype(jnp.float32)
    s = jnp.sum(jnp.sum(x, axis=0), axis=1, keepdims=True)        # (C, 1)
    q = jnp.sum(jnp.sum(x * x, axis=0), axis=1, keepdims=True)    # (C, 1)
    mean = s * inv_total
    var = jnp.maximum(q * inv_total - mean * mean, 0.0)
    inv_std = 1.0 / jnp.sqrt(var + eps)                           # (C, 1)
    scale = gamma_ref[...] * inv_std
    bias = beta_ref[...] - mean * scale
    y_ref[...] = (x * scale[None] + bias[None]).astype(y_ref.dtype)
    mean_ref[...] = mean
    var_ref[...] = var


def _stats_kernel(x_ref, sum_ref, sq_ref):
    """Per-row partial sum / sum-of-squares for one (row_tile, m_tile) block.

    Each (ri, mi) grid cell writes its own partial block, so both grid axes
    are "parallel" (v7x megacore friendly) and the steady state carries no
    resident-accumulator dependency.
    """
    x = x_ref[...].astype(jnp.float32)                             # (rt, mt)
    sum_ref[...] = jnp.sum(x, axis=1, keepdims=True)[None]         # (1, rt, 1)
    sq_ref[...] = jnp.sum(x * x, axis=1, keepdims=True)[None]      # (1, rt, 1)


def _norm_kernel(x_ref, scale_ref, bias_ref, y_ref):
    """y = x * scale + bias per row (one FMA per element).

    Compute dtype follows scale_ref: f32 normally, bf16-native for bf16
    inputs (no per-tile f32 upcast temporary on v6e/v7x).
    """
    x = x_ref[...].astype(scale_ref.dtype)                         # (rt, mt)
    y_ref[...] = (x * scale_ref[...] + bias_ref[...]).astype(y_ref.dtype)


# --------------------------------------------------------------------------
# Tiling helpers
# --------------------------------------------------------------------------
def _sublane_granule(itemsize):
    # 8 for 4-byte, 16 for 2-byte, 32 for 1-byte dtypes.
    return max(8, 32 // max(int(itemsize), 1))


def _pick_tiles(rows, hw, itemsize, target_bytes):
    """Pick (row_tile, m_tile) for the (rows, hw) layout.

    m_tile must be a multiple of 128 dividing hw, or hw itself; row_tile a
    multiple of the sublane granule dividing rows, or rows itself.
    """
    g = _sublane_granule(itemsize)
    lane_opts = sorted({d for d in range(128, hw + 1, 128) if hw % d == 0} | {hw},
                       reverse=True)
    m_tile = lane_opts[-1]
    for m in lane_opts:
        if g * m * itemsize <= target_bytes:
            m_tile = m
            break
    row_opts = sorted({d for d in range(g, rows + 1, g) if rows % d == 0} | {rows},
                      reverse=True)
    row_tile = row_opts[-1]
    for r in row_opts:
        if r * m_tile * itemsize <= target_bytes:
            row_tile = r
            break
    return row_tile, m_tile


def _normalize_rows(x2, scale_rows, bias_rows, target_bytes):
    """Tiled y = x * scale + bias over the 2-D (rows, hw) layout."""
    rows, hw = x2.shape
    itemsize = jnp.dtype(x2.dtype).itemsize
    row_tile, m_tile = _pick_tiles(rows, hw, itemsize, target_bytes)
    rg, mg = rows // row_tile, hw // m_tile
    return pl.pallas_call(
        _norm_kernel,
        out_shape=jax.ShapeDtypeStruct((rows, hw), x2.dtype),
        grid=(rg, mg),
        in_specs=[
            pl.BlockSpec((row_tile, m_tile), lambda ri, mi: (ri, mi)),
            pl.BlockSpec((row_tile, 1), lambda ri, mi: (ri, 0)),
            pl.BlockSpec((row_tile, 1), lambda ri, mi: (ri, 0)),
        ],
        out_specs=pl.BlockSpec((row_tile, m_tile), lambda ri, mi: (ri, mi)),
        compiler_params=pltpu.CompilerParams(
            dimension_semantics=("parallel", "parallel"),
            vmem_limit_bytes=_TILED_VMEM_LIMIT),
    )(x2, scale_rows, bias_rows)


# --------------------------------------------------------------------------
# Public entry points
# --------------------------------------------------------------------------
def batch_norm_train(x_nchw, gamma, beta, moving_mean, moving_var,
                     eps=EPS, momentum=MOMENTUM,
                     fused_threshold_bytes=_FUSED_THRESHOLD_BYTES,
                     target_block_bytes=_TILED_TARGET_BLOCK_BYTES):
    """Training-mode BatchNorm2d forward.

    Args:
      x_nchw: (N, C, H, W); gamma/beta/moving_mean/moving_var: (1, C, 1, 1)
    Returns:
      y (N, C, H, W), new_moving_mean (1,C,1,1), new_moving_var (1,C,1,1)
    """
    n, c, h, w = x_nchw.shape
    hw = h * w
    rows = n * c
    total = float(n * hw)
    gamma_c = gamma.reshape(c).astype(jnp.float32)
    beta_c = beta.reshape(c).astype(jnp.float32)

    if rows * hw * 4 <= fused_threshold_bytes:
        # ---- Fused single-block fast path: one kernel, whole x resident. ----
        x3 = x_nchw.reshape(n, c, hw)
        kernel = functools.partial(_fused_bn_kernel, eps=eps,
                                   inv_total=1.0 / total)
        y3, mean2, var2 = pl.pallas_call(
            kernel,
            out_shape=(
                jax.ShapeDtypeStruct((n, c, hw), x_nchw.dtype),
                jax.ShapeDtypeStruct((c, 1), jnp.float32),
                jax.ShapeDtypeStruct((c, 1), jnp.float32),
            ),
            compiler_params=pltpu.CompilerParams(
                vmem_limit_bytes=_FUSED_VMEM_LIMIT),
        )(x3, gamma_c.reshape(c, 1), beta_c.reshape(c, 1))
        y = y3.reshape(n, c, h, w)
        mean = mean2.reshape(c)
        var = var2.reshape(c)
    else:
        # ---- Tiled two-pass path over a 2-D (N*C, HW) layout. ----
        x2 = x_nchw.reshape(rows, hw)
        itemsize = jnp.dtype(x_nchw.dtype).itemsize
        row_tile, m_tile = _pick_tiles(rows, hw, itemsize, target_block_bytes)
        rg, mg = rows // row_tile, hw // m_tile

        # Pass 1: per-(row-block, spatial-block) partial sums (both axes parallel).
        sums, sqs = pl.pallas_call(
            _stats_kernel,
            out_shape=(jax.ShapeDtypeStruct((mg, rows, 1), jnp.float32),
                       jax.ShapeDtypeStruct((mg, rows, 1), jnp.float32)),
            grid=(rg, mg),
            in_specs=[pl.BlockSpec((row_tile, m_tile), lambda ri, mi: (ri, mi))],
            out_specs=(pl.BlockSpec((1, row_tile, 1), lambda ri, mi: (mi, ri, 0)),
                       pl.BlockSpec((1, row_tile, 1), lambda ri, mi: (mi, ri, 0))),
            compiler_params=pltpu.CompilerParams(
                dimension_semantics=("parallel", "parallel"),
                vmem_limit_bytes=_TILED_VMEM_LIMIT),
        )(x2)

        # Tiny per-channel fold in plain JAX.
        s = jnp.sum(jnp.sum(sums[:, :, 0], axis=0).reshape(n, c), axis=0)  # (C,)
        q = jnp.sum(jnp.sum(sqs[:, :, 0], axis=0).reshape(n, c), axis=0)   # (C,)
        mean = s / total
        var = jnp.maximum(q / total - mean * mean, 0.0)

        inv_std = lax.rsqrt(var + eps)
        scale_c = gamma_c * inv_std
        bias_c = beta_c - mean * scale_c
        compute_dtype = (jnp.bfloat16 if x_nchw.dtype == jnp.bfloat16
                         else jnp.float32)
        scale_rows = jnp.tile(scale_c, n).reshape(rows, 1).astype(compute_dtype)
        bias_rows = jnp.tile(bias_c, n).reshape(rows, 1).astype(compute_dtype)

        # Pass 2: normalize (single FMA per element).
        y = _normalize_rows(x2, scale_rows, bias_rows,
                            target_block_bytes).reshape(n, c, h, w)

    # Moving-statistics update (C-sized, plain JAX).
    mm = moving_mean.reshape(c).astype(jnp.float32)
    mv = moving_var.reshape(c).astype(jnp.float32)
    new_mm = momentum * mm + (1.0 - momentum) * mean
    new_mv = momentum * mv + (1.0 - momentum) * var
    return (y,
            new_mm.reshape(1, c, 1, 1).astype(moving_mean.dtype),
            new_mv.reshape(1, c, 1, 1).astype(moving_var.dtype))


def batch_norm_infer(x_nchw, gamma, beta, moving_mean, moving_var, eps=EPS,
                     target_block_bytes=_TILED_TARGET_BLOCK_BYTES):
    """Inference-mode BatchNorm2d forward using moving statistics."""
    n, c, h, w = x_nchw.shape
    hw = h * w
    rows = n * c
    mv = moving_var.reshape(c).astype(jnp.float32)
    mm = moving_mean.reshape(c).astype(jnp.float32)
    scale_c = gamma.reshape(c).astype(jnp.float32) / jnp.sqrt(mv + eps)
    bias_c = beta.reshape(c).astype(jnp.float32) - mm * scale_c
    compute_dtype = jnp.bfloat16 if x_nchw.dtype == jnp.bfloat16 else jnp.float32
    scale_rows = jnp.tile(scale_c, n).reshape(rows, 1).astype(compute_dtype)
    bias_rows = jnp.tile(bias_c, n).reshape(rows, 1).astype(compute_dtype)
    y2 = _normalize_rows(x_nchw.reshape(rows, hw), scale_rows, bias_rows,
                         target_block_bytes)
    return y2.reshape(n, c, h, w)


def reference_batch_norm(x, gamma, beta, moving_mean, moving_var,
                         eps=EPS, momentum=MOMENTUM):
    mean = x.mean(axis=(0, 2, 3), keepdims=True)
    var = ((x - mean) ** 2).mean(axis=(0, 2, 3), keepdims=True)
    x_hat = (x - mean) / jnp.sqrt(var + eps)
    new_mm = momentum * moving_mean + (1.0 - momentum) * mean
    new_mv = momentum * moving_var + (1.0 - momentum) * var
    return gamma * x_hat + beta, new_mm, new_mv


if __name__ == "__main__":
    key = jax.random.PRNGKey(0)
    k1, k2 = jax.random.split(key)

    # --- Test 1: module shapes BatchNorm(num_features=4, num_dims=4) ---------
    #     (2, 4, 16, 16) -> exercises the fused single-block fast path.
    N, C, H, W = 2, 4, 16, 16
    x = jax.random.normal(k1, (N, C, H, W), dtype=jnp.float32)
    gamma = jnp.ones((1, C, 1, 1), jnp.float32)
    beta = jnp.zeros((1, C, 1, 1), jnp.float32)
    moving_mean = jnp.zeros((1, C, 1, 1), jnp.float32)
    moving_var = jnp.ones((1, C, 1, 1), jnp.float32)

    y, new_mm, new_mv = batch_norm_train(x, gamma, beta, moving_mean, moving_var)
    jax.block_until_ready((y, new_mm, new_mv))

    y_ref, mm_ref, mv_ref = reference_batch_norm(
        x, gamma, beta, moving_mean, moving_var)
    assert y.shape == (N, C, H, W)
    assert new_mm.shape == (1, C, 1, 1) and new_mv.shape == (1, C, 1, 1)
    assert jnp.allclose(y, y_ref, atol=1e-5, rtol=1e-5)
    assert jnp.allclose(new_mm, mm_ref, atol=1e-5, rtol=1e-5)
    assert jnp.allclose(new_mv, mv_ref, atol=1e-5, rtol=1e-5)

    # --- Test 2: force the tiled two-pass path on a small 2x2 grid. ----------
    N2, C2, H2, W2 = 2, 8, 32, 32
    x2 = jax.random.normal(k2, (N2, C2, H2, W2), dtype=jnp.float32) * 2.0 + 0.5
    g2 = jnp.full((1, C2, 1, 1), 1.5, jnp.float32)
    b2 = jnp.full((1, C2, 1, 1), -0.25, jnp.float32)
    mm2 = jnp.zeros((1, C2, 1, 1), jnp.float32)
    mv2 = jnp.ones((1, C2, 1, 1), jnp.float32)

    y2, nmm2, nmv2 = batch_norm_train(
        x2, g2, b2, mm2, mv2,
        fused_threshold_bytes=0, target_block_bytes=16 * 1024)
    jax.block_until_ready((y2, nmm2, nmv2))
    y2_ref, mm2_ref, mv2_ref = reference_batch_norm(x2, g2, b2, mm2, mv2)
    assert jnp.allclose(y2, y2_ref, atol=1e-4, rtol=1e-4)
    assert jnp.allclose(nmm2, mm2_ref, atol=1e-4, rtol=1e-4)
    assert jnp.allclose(nmv2, mv2_ref, atol=1e-4, rtol=1e-4)

    # --- Test 3: inference-mode (moving statistics) path. --------------------
    yi = batch_norm_infer(x2, g2, b2, nmm2, nmv2)
    jax.block_until_ready(yi)
    yi_ref = g2 * (x2 - nmm2) / jnp.sqrt(nmv2 + EPS) + b2
    assert jnp.allclose(yi, yi_ref, atol=1e-4, rtol=1e-4)

    print("KERNEL_OK")
</pallas_src>

<mosaic_0001>
module attributes {stable_mosaic.version = 11 : i64} {
  func.func @_fused_bn_kernel(%arg0: memref<2x4x256xf32, #tpu.memory_space<vmem>>, %arg1: memref<4x1xf32, #tpu.memory_space<vmem>>, %arg2: memref<4x1xf32, #tpu.memory_space<vmem>>, %arg3: memref<2x4x256xf32, #tpu.memory_space<vmem>>, %arg4: memref<4x1xf32, #tpu.memory_space<vmem>>, %arg5: memref<4x1xf32, #tpu.memory_space<vmem>>) attributes {dimension_semantics = [], scalar_prefetch = 0 : i64, scratch_operands = 0 : i64, tpu.core_type = #tpu.core_type<tc>} {
    %c0 = arith.constant 0 : index
    %c0_0 = arith.constant 0 : index
    %c0_1 = arith.constant 0 : index
    %0 = vector.load %arg0[%c0, %c0_0, %c0_1] : memref<2x4x256xf32, #tpu.memory_space<vmem>>, vector<2x4x256xf32>
    %cst = arith.constant dense<0.000000e+00> : vector<4x256xf32>
    %1 = vector.multi_reduction <add>, %0, %cst [0] : vector<2x4x256xf32> to vector<4x256xf32>
    %cst_2 = arith.constant dense<0.000000e+00> : vector<4xf32>
    %2 = vector.multi_reduction <add>, %1, %cst_2 [1] : vector<4x256xf32> to vector<4xf32>
    %3 = vector.shape_cast %2 : vector<4xf32> to vector<4x1xf32>
    %4 = arith.mulf %0, %0 : vector<2x4x256xf32>
    %cst_3 = arith.constant dense<0.000000e+00> : vector<4x256xf32>
    %5 = vector.multi_reduction <add>, %4, %cst_3 [0] : vector<2x4x256xf32> to vector<4x256xf32>
    %cst_4 = arith.constant dense<0.000000e+00> : vector<4xf32>
    %6 = vector.multi_reduction <add>, %5, %cst_4 [1] : vector<4x256xf32> to vector<4xf32>
    %7 = vector.shape_cast %6 : vector<4xf32> to vector<4x1xf32>
    %cst_5 = arith.constant 0.001953125 : f32
    %8 = vector.broadcast %cst_5 : f32 to vector<4x1xf32>
    %9 = arith.mulf %3, %8 : vector<4x1xf32>
    %cst_6 = arith.constant 0.001953125 : f32
    %10 = vector.broadcast %cst_6 : f32 to vector<4x1xf32>
    %11 = arith.mulf %7, %10 : vector<4x1xf32>
    %12 = arith.mulf %9, %9 : vector<4x1xf32>
    %13 = arith.subf %11, %12 : vector<4x1xf32>
    %cst_7 = arith.constant 0.000000e+00 : f32
    %14 = vector.broadcast %cst_7 : f32 to vector<4x1xf32>
    %15 = arith.maximumf %13, %14 : vector<4x1xf32>
    %cst_8 = arith.constant 9.99999974E-6 : f32
    %16 = vector.broadcast %cst_8 : f32 to vector<4x1xf32>
    %17 = arith.addf %15, %16 : vector<4x1xf32>
    %18 = math.sqrt %17 : vector<4x1xf32>
    %cst_9 = arith.constant 1.000000e+00 : f32
    %19 = vector.broadcast %cst_9 : f32 to vector<4x1xf32>
    %20 = arith.divf %19, %18 : vector<4x1xf32>
    %c0_10 = arith.constant 0 : index
    %c0_11 = arith.constant 0 : index
    %21 = vector.load %arg1[%c0_10, %c0_11] : memref<4x1xf32, #tpu.memory_space<vmem>>, vector<4x1xf32>
    %22 = arith.mulf %21, %20 : vector<4x1xf32>
    %c0_12 = arith.constant 0 : index
    %c0_13 = arith.constant 0 : index
    %23 = vector.load %arg2[%c0_12, %c0_13] : memref<4x1xf32, #tpu.memory_space<vmem>>, vector<4x1xf32>
    %24 = arith.mulf %9, %22 : vector<4x1xf32>
    %25 = arith.subf %23, %24 : vector<4x1xf32>
    %26 = vector.shape_cast %22 : vector<4x1xf32> to vector<1x4x1xf32>
    %27 = vector.broadcast %26 : vector<1x4x1xf32> to vector<2x4x256xf32>
    %28 = arith.mulf %0, %27 : vector<2x4x256xf32>
    %29 = vector.shape_cast %25 : vector<4x1xf32> to vector<1x4x1xf32>
    %30 = vector.broadcast %29 : vector<1x4x1xf32> to vector<2x4x256xf32>
    %31 = arith.addf %28, %30 : vector<2x4x256xf32>
    %c0_14 = arith.constant 0 : index
    %c0_15 = arith.constant 0 : index
    %c0_16 = arith.constant 0 : index
    %32 = vector.load %arg3[%c0_14, %c0_15, %c0_16] : memref<2x4x256xf32, #tpu.memory_space<vmem>>, vector<2x4x256xf32>
    tpu.vector_store %arg3[%c0_14, %c0_15, %c0_16], %31 {strides = array<i32>} : memref<2x4x256xf32, #tpu.memory_space<vmem>>, vector<2x4x256xf32>,
    %c0_17 = arith.constant 0 : index
    %c0_18 = arith.constant 0 : index
    %33 = vector.load %arg4[%c0_17, %c0_18] : memref<4x1xf32, #tpu.memory_space<vmem>>, vector<4x1xf32>
    tpu.vector_store %arg4[%c0_17, %c0_18], %9 {strides = array<i32>} : memref<4x1xf32, #tpu.memory_space<vmem>>, vector<4x1xf32>,
    %c0_19 = arith.constant 0 : index
    %c0_20 = arith.constant 0 : index
    %34 = vector.load %arg5[%c0_19, %c0_20] : memref<4x1xf32, #tpu.memory_space<vmem>>, vector<4x1xf32>
    tpu.vector_store %arg5[%c0_19, %c0_20], %15 {strides = array<i32>} : memref<4x1xf32, #tpu.memory_space<vmem>>, vector<4x1xf32>,
    return
  }
}

</mosaic_0001>

<llo_original>
// kernel: tpu_custom_call.1
$region0: #{tpu_custom_call.1}
  #allocation0 [shape = 'u32[]', space=smem, size = 0x4, offset = 0x4, fixed_abs, tag = 'smem constant byte address 0x4 - core index']
  #allocation1 [shape = 'u32[144,128]{1,0:T(1,128)}', space=vmem, size = 0x12000, scoped, tag = 'internal scratch']
  %s0 = inlined_call_operand.hbm [shape: f32[2,4,256], index: 0, kind: input, shape index: {}]
  %s1 = inlined_call_operand.vmem [shape: f32[4,1], index: 1, kind: input, shape index: {}]
  %s2 = inlined_call_operand.vmem [shape: f32[4,1], index: 2, kind: input, shape index: {}]
  %s3 = inlined_call_operand.hbm [shape: f32[2,4,256], index: 3, kind: output, shape index: {0}]
  %s4 = inlined_call_operand.vmem [shape: f32[4,1], index: 4, kind: output, shape index: {1}]
  %s5 = inlined_call_operand.vmem [shape: f32[4,1], index: 5, kind: output, shape index: {2}]
  %6 = xla_tuple %s3, %s4, %s5
  %s7 = sld [smem:[#allocation0]]
  $region42: #{tpu_custom_call.1} parent=0
    _
  %s9 = ssub.s32 1, %s7
  %s10 = scalar_select 0, %s9, %s7
  $region1: #{tpu_custom_call.1} parent=0
    #allocation2 [shape = 'u8[8192]{0}', space=vmem, size = 0x2000, scoped, tag = 'input window, operand 0, single buffered']
    #allocation3 [shape = 's32[1]{0}', space=sflag, size = 0x4, scoped, tag = 'scoped memory for tpu_custom_call.1']
    #allocation4 [shape = 's32[1]{0}', space=sflag, size = 0x4, scoped, tag = 'scoped memory for tpu_custom_call.1']
    #allocation5 [shape = 'u8[8192]{0}', space=vmem, size = 0x2000, scoped, tag = 'output window, operand 0, single buffered']
    %11 = vsyncpa [#allocation3], 0
    %12 = vsyncpa [#allocation4], 0
    // Predicated region
    $region2: #{tpu_custom_call.1} parent=1 // pred_check
      _
    $region3: #{tpu_custom_call.1} parent=1 // pred_check_branch
      %14 = sbr.rel (0) target = $region5
    $region4: #{tpu_custom_call.1} parent=1 // pred_region
      %s16 = ssub.s32 256, 256
      %17 = vsyncadd [#allocation3], %s16
      %s18 = sshll.u32 [#allocation2], 4
      %s19 = int_to_ptr.vmem [resolvable:$true] %s18
      %24 = dma.hbm_to_vmem [thread:$0]  %s0, 256, %s19, [#allocation3], 128, 128, 8
    $region5: #{tpu_custom_call.1} parent=1 // pred_fallthru
      _
    // Predicated region
    $region6: #{tpu_custom_call.1} parent=1 // pred_check
      _
    $region7: #{tpu_custom_call.1} parent=1 // pred_check_branch
      %26 = sbr.rel (0) target = $region9
    $region8: #{tpu_custom_call.1} parent=1 // pred_region
      _
    $region9: #{tpu_custom_call.1} parent=1 // pred_fallthru
      _
    // Predicated region
    $region10: #{tpu_custom_call.1} parent=1 // pred_check
      _
    $region11: #{tpu_custom_call.1} parent=1 // pred_check_branch
      %28 = sbr.rel (0) target = $region13
    $region12: #{tpu_custom_call.1} parent=1 // pred_region
      _
    $region13: #{tpu_custom_call.1} parent=1 // pred_fallthru
      _
    // Predicated region
    $region14: #{tpu_custom_call.1} parent=1 // pred_check
      _
    $region15: #{tpu_custom_call.1} parent=1 // pred_check_branch
      %30 = sbr.rel (0) target = $region17
    $region16: #{tpu_custom_call.1} parent=1 // pred_region
      %31 = dma.done [#allocation3], 256
    $region17: #{tpu_custom_call.1} parent=1 // pred_fallthru
      _
    %v32 = vld [vmem:[#allocation2] sm:$0xff]
    %v33 = vld [vmem:[#allocation2 + $0x8] sm:$0xff]
    %v36 = vcombine.high %v32, %v32
    %v37 = vcombine.high %v33, %v33
    %vm40 = vcmask 1043456
    %v41 = vsel %vm40, %v32, 0.0
    %v42 = vsel %vm40, %v33, 0.0
    %v43 = vadd.f32 %v41, %v42
    %v44 = vsel %vm40, %v36, 0.0
    %v45 = vsel %vm40, %v37, 0.0
    %v46 = vadd.f32 %v44, %v45
    %v47 = vsel %vm40, %v43, 0.0
    %v48 = vsel %vm40, %v46, 0.0
    %v49 = vadd.f32 %v47, %v48
    %50 = vadd.xlane.f32.xlu0 %v49
    %v51 = vpop.xlane.xlu0 %50
    %v52 = vmul.f32 %v32, %v32
    %v53 = vmul.f32 %v33, %v33
    %v56 = vcombine.high %v52, %v52
    %v57 = vcombine.high %v53, %v53
    %v60 = vsel %vm40, %v52, 0.0
    %v61 = vsel %vm40, %v53, 0.0
    %v62 = vadd.f32 %v60, %v61
    %v63 = vsel %vm40, %v56, 0.0
    %v64 = vsel %vm40, %v57, 0.0
    %v65 = vadd.f32 %v63, %v64
    %v66 = vsel %vm40, %v62, 0.0
    %v67 = vsel %vm40, %v65, 0.0
    %v68 = vadd.f32 %v66, %v67
    %69 = vadd.xlane.f32.xlu0 %v68
    %v70 = vpop.xlane.xlu0 %69
    %v71 = vmul.f32 %v51, 0.001953125
    %v72 = vmul.f32 %v70, 0.001953125
    %v73 = vmul.f32 %v71, %v71
    %v74 = vsub.f32 %v72, %v73
    %v75 = vmax.f32 %v74, 0.0
    %v76 = vadd.f32 %v75, 1e-05
    %v77 = vrsqrt.pop %v76
    %v78 = vmul.f32 %v76, %v77
    %vm79 = vcmp.eq.f32.partialorder %v76, inf
    %v80 = vsel %vm79, %v76, %v78
    %vm81 = vcmp.eq.f32.partialorder %v76, 0.0
    %v82 = vand.u32 %v76, 2147483648
    %v83 = vsel %vm81, %v82, %v80
    %v84 = vrcp.pop %v83
    %v85 = vmul.f32 1.0, %v84
    %v86 = vld [vmem:[%s1] sm:$0xf]
    %v87 = vmul.f32 %v86, %v85
    %v88 = vld [vmem:[%s2] sm:$0xf]
    %v89 = vmul.f32 %v71, %v87
    %v90 = vsub.f32 %v88, %v89
    %92 = vset.pattern.permute.xlu0 0
    %93 = vperm.xlu0 %92, %v87
    %v94 = vpop.permute.xlu0 %93
    %v96 = vunpack.c.l.s4 839922192
    %v97 = vunpack.c.0.s8 %v96
    %v98 = vlaneseq
    %v99 = vshrl.u32 %v98, 7
    %v100 = vsub.s32 %v97, %v99
    %v101 = vrot.slane %v94, %v100
    %v103 = vmul.f32 %v32, %v101
    %v104 = vmul.f32 %v33, %v101
    %106 = vset.pattern.permute.xlu0 0
    %107 = vperm.xlu0 %106, %v90
    %v108 = vpop.permute.xlu0 %107
    %v110 = vunpack.c.l.s4 839922192
    %v111 = vunpack.c.0.s8 %v110
    %v112 = vlaneseq
    %v113 = vshrl.u32 %v112, 7
    %v114 = vsub.s32 %v111, %v113
    %v115 = vrot.slane %v108, %v114
    %v117 = vadd.f32 %v103, %v115
    %v118 = vadd.f32 %v104, %v115
    %119 = vst [vmem:[#allocation5] sm:$0xff] %v117
    %120 = vst [vmem:[#allocation5 + $0x8] sm:$0xff] %v118
    %vm121 = vcmask 3072
    %122 = vst.msk [vmem:[%s4] sm:$0xf] %vm121, %v71
    %123 = vst.msk [vmem:[%s5] sm:$0xf] %vm121, %v75
    // Predicated region
    $region18: #{tpu_custom_call.1} parent=1 // pred_check
      _
    $region19: #{tpu_custom_call.1} parent=1 // pred_check_branch
      %125 = sbr.rel (0) target = $region21
    $region20: #{tpu_custom_call.1} parent=1 // pred_region
      %s127 = ssub.s32 256, 256
      %128 = vsyncadd [#allocation4], %s127
      %s129 = sshll.u32 [#allocation5], 4
      %s130 = int_to_ptr.vmem [resolvable:$true] %s129
      %135 = dma.vmem_to_hbm [thread:$0]  %s130, 256, %s3, [#allocation4], 128, 128, 8
    $region21: #{tpu_custom_call.1} parent=1 // pred_fallthru
      _
    // Predicated region
    $region22: #{tpu_custom_call.1} parent=1 // pred_check
      _
    $region23: #{tpu_custom_call.1} parent=1 // pred_check_branch
      %137 = sbr.rel (0) target = $region25
    $region24: #{tpu_custom_call.1} parent=1 // pred_region
      _
    $region25: #{tpu_custom_call.1} parent=1 // pred_fallthru
      _
    // Predicated region
    $region26: #{tpu_custom_call.1} parent=1 // pred_check
      _
    $region27: #{tpu_custom_call.1} parent=1 // pred_check_branch
      %139 = sbr.rel (0) target = $region29
    $region28: #{tpu_custom_call.1} parent=1 // pred_region
      _
    $region29: #{tpu_custom_call.1} parent=1 // pred_fallthru
      _
    // Predicated region
    $region30: #{tpu_custom_call.1} parent=1 // pred_check
      _
    $region31: #{tpu_custom_call.1} parent=1 // pred_check_branch
      %141 = sbr.rel (0) target = $region33
    $region32: #{tpu_custom_call.1} parent=1 // pred_region
      %142 = dma.done [#allocation4], 256
    $region33: #{tpu_custom_call.1} parent=1 // pred_fallthru
      _
    // Predicated region
    $region34: #{tpu_custom_call.1} parent=1 // pred_check
      _
    $region35: #{tpu_custom_call.1} parent=1 // pred_check_branch
      %144 = sbr.rel (0) target = $region37
    $region36: #{tpu_custom_call.1} parent=1 // pred_region
      _
    $region37: #{tpu_custom_call.1} parent=1 // pred_fallthru
      _
    // Predicated region
    $region38: #{tpu_custom_call.1} parent=1 // pred_check
      _
    $region39: #{tpu_custom_call.1} parent=1 // pred_check_branch
      %146 = sbr.rel (0) target = $region41
    $region40: #{tpu_custom_call.1} parent=1 // pred_region
      _
    $region41: #{tpu_custom_call.1} parent=1 // pred_fallthru
      _
    %147 = vsyncpa [#allocation3], 1
    %148 = vsyncpa [#allocation4], 1

</llo_original>
